<compile_context>
chip_gen: v7x
topology: tpu7x:2x2x1
jax: 0.10.0
libtpu: 0.0.40
codegen_flags: <defaults>
</compile_context>

<pallas_src>
import functools

import jax
import jax.numpy as jnp
from jax.experimental import pallas as pl
from jax.experimental.pallas import tpu as pltpu


def _mean_all_kernel(x_ref, o_ref, acc_ref, *, total_rows, tile_rows, inv_count):
    """Row-tiled full reduction: running (1, N) sums, finalize -> scalar mean."""
    i = pl.program_id(0)

    @pl.when(i == 0)
    def _init():
        acc_ref[...] = jnp.zeros_like(acc_ref)

    # f32 accumulation regardless of input dtype (f32 here, bf16-safe too).
    x = x_ref[...].astype(jnp.float32)  # (tile_rows, N)

    if total_rows % tile_rows != 0:
        # Last tile is ragged: zero out rows that fall past the true array end.
        row = i * tile_rows + jax.lax.broadcasted_iota(jnp.int32, x.shape, 0)
        x = jnp.where(row < total_rows, x, 0.0)

    # Partial reduce over the sublane (row) axis only -> stays on the VALU;
    # lanes are reduced exactly once, at finalize.
    acc_ref[...] += jnp.sum(x, axis=0, keepdims=True)  # (1, N) f32

    @pl.when(i == pl.num_programs(0) - 1)
    def _finalize():
        total = jnp.sum(acc_ref[...])                       # single XLU reduce
        mean_val = (total * inv_count).astype(o_ref.dtype)  # one scale, cast once
        o_ref[...] = jnp.broadcast_to(mean_val, (1, 1))


def mean_all(x, *, tile_bytes=4 * 1024 * 1024):
    """Pallas equivalent of torch.ops.aten.mean(x): 0-d mean over all elements.

    NOTE: for production, tiny inputs (a few KiB) should just dispatch to
    jnp.mean — pallas_call launch overhead dominates there. Kept on the Pallas
    path here so the kernel is exercised.
    """
    orig_dtype = x.dtype
    # Flatten to 2-D, keeping the last (lane) dimension contiguous.
    x2 = x.reshape(1, -1) if x.ndim < 2 else x.reshape(-1, x.shape[-1])
    M, N = x2.shape
    n_elems = M * N

    # Row-tile so one input buffer is <= ~tile_bytes (TM multiple of 8 unless
    # the whole array fits in a single block).
    bytes_per_row = max(N * 4, 1)
    max_rows = max(8, (tile_bytes // bytes_per_row) // 8 * 8)
    tile_rows = M if M <= max_rows else max_rows
    grid = (pl.cdiv(M, tile_rows),)

    kernel = functools.partial(
        _mean_all_kernel,
        total_rows=M,
        tile_rows=tile_rows,
        inv_count=1.0 / float(n_elems),
    )

    out = pl.pallas_call(
        kernel,
        out_shape=jax.ShapeDtypeStruct((1, 1), orig_dtype),
        grid_spec=pltpu.PrefetchScalarGridSpec(
            num_scalar_prefetch=0,
            grid=grid,
            in_specs=[pl.BlockSpec((tile_rows, N), lambda m: (m, 0))],
            out_specs=pl.BlockSpec((1, 1), lambda m: (0, 0)),
            scratch_shapes=[pltpu.VMEM((1, N), jnp.float32)],
        ),
        # Single grid axis is the reduction (output block resident across it).
        compiler_params=pltpu.CompilerParams(
            dimension_semantics=("arbitrary",),
        ),
        cost_estimate=pl.CostEstimate(
            flops=n_elems,
            transcendentals=0,
            bytes_accessed=n_elems * x2.dtype.itemsize + orig_dtype.itemsize,
        ),
    )(x2)
    # aten.mean(x) returns a 0-d tensor.
    return out.reshape(())


if __name__ == "__main__":
    key = jax.random.PRNGKey(0)

    # Shape from the module's annotation: ([3, 4], float32).
    x = jax.random.normal(key, (3, 4), dtype=jnp.float32)
    out = jax.block_until_ready(mean_all(x))
    ref = jnp.mean(x)
    assert out.shape == (), out.shape
    assert jnp.allclose(out, ref, atol=1e-6, rtol=1e-6), (out, ref)

    # Extra robustness check: multi-tile reduction path with a ragged last tile
    # (small tile_bytes forces tiling + in-kernel masking).
    key2 = jax.random.PRNGKey(0)
    x_big = jax.random.normal(key2, (2048, 384), dtype=jnp.float32)
    out_big = jax.block_until_ready(mean_all(x_big, tile_bytes=64 * 1024))
    ref_big = jnp.mean(x_big)
    assert jnp.allclose(out_big, ref_big, atol=1e-5, rtol=1e-5), (out_big, ref_big)

    print("KERNEL_OK")
</pallas_src>

<mosaic_0001>
module attributes {stable_mosaic.version = 11 : i64} {
  func.func @_mean_all_kernel(%arg0: i32, %arg1: memref<3x4xf32, #tpu.memory_space<vmem>>, %arg2: memref<1x1xf32, #tpu.memory_space<vmem>>, %arg3: memref<1x4xf32, #tpu.memory_space<vmem>>) attributes {dimension_semantics = [#tpu.dimension_semantics<arbitrary>], iteration_bounds = array<i64: 1>, scalar_prefetch = 0 : i64, scratch_operands = 1 : i64, tpu.core_type = #tpu.core_type<tc>, window_params = [{transform_indices = @transform_0, window_bounds = array<i64: 3, 4>}, {pipeline_mode = #tpu.pipeline_mode<synchronous>, transform_indices = @transform_1, window_bounds = array<i64: 1, 1>}]} {
    %c0_i32 = arith.constant 0 : i32
    %0 = arith.cmpi eq, %arg0, %c0_i32 : i32
    %1 = arith.extui %0 : i1 to i32
    %c0_i32_0 = arith.constant 0 : i32
    %2 = arith.cmpi ne, %1, %c0_i32_0 : i32
    scf.if %2 {
      %cst_8 = arith.constant 0.000000e+00 : f32
      %12 = vector.broadcast %cst_8 : f32 to vector<1x4xf32>
      %c0_9 = arith.constant 0 : index
      %c0_10 = arith.constant 0 : index
      %13 = vector.load %arg3[%c0_9, %c0_10] : memref<1x4xf32, #tpu.memory_space<vmem>>, vector<1x4xf32>
      tpu.vector_store %arg3[%c0_9, %c0_10], %12 {strides = array<i32>} : memref<1x4xf32, #tpu.memory_space<vmem>>, vector<1x4xf32>,
    } else {
    }
    %c0 = arith.constant 0 : index
    %c0_1 = arith.constant 0 : index
    %3 = vector.load %arg1[%c0, %c0_1] : memref<3x4xf32, #tpu.memory_space<vmem>>, vector<3x4xf32>
    %c0_2 = arith.constant 0 : index
    %c0_3 = arith.constant 0 : index
    %4 = vector.load %arg3[%c0_2, %c0_3] : memref<1x4xf32, #tpu.memory_space<vmem>>, vector<1x4xf32>
    %cst = arith.constant dense<0.000000e+00> : vector<4xf32>
    %5 = vector.multi_reduction <add>, %3, %cst [0] : vector<3x4xf32> to vector<4xf32>
    %6 = vector.shape_cast %5 : vector<4xf32> to vector<1x4xf32>
    %7 = arith.addf %4, %6 : vector<1x4xf32>
    %c0_4 = arith.constant 0 : index
    %c0_5 = arith.constant 0 : index
    %8 = vector.load %arg3[%c0_4, %c0_5] : memref<1x4xf32, #tpu.memory_space<vmem>>, vector<1x4xf32>
    tpu.vector_store %arg3[%c0_4, %c0_5], %7 {strides = array<i32>} : memref<1x4xf32, #tpu.memory_space<vmem>>, vector<1x4xf32>,
    %c0_i32_6 = arith.constant 0 : i32
    %9 = arith.cmpi eq, %arg0, %c0_i32_6 : i32
    %10 = arith.extui %9 : i1 to i32
    %c0_i32_7 = arith.constant 0 : i32
    %11 = arith.cmpi ne, %10, %c0_i32_7 : i32
    scf.if %11 {
      %c0_8 = arith.constant 0 : index
      %c0_9 = arith.constant 0 : index
      %12 = vector.load %arg3[%c0_8, %c0_9] : memref<1x4xf32, #tpu.memory_space<vmem>>, vector<1x4xf32>
      %13 = vector.shape_cast %12 : vector<1x4xf32> to vector<1x1x4xf32>
      %cst_10 = arith.constant dense<0.000000e+00> : vector<1xf32>
      %14 = vector.multi_reduction <add>, %13, %cst_10 [1, 2] : vector<1x1x4xf32> to vector<1xf32>
      %15 = vector.shape_cast %14 : vector<1xf32> to vector<1x1x1xf32>
      %16 = vector.extract %15[0, 0, 0] : f32 from vector<1x1x1xf32>
      %cst_11 = arith.constant 0.0833333358 : f32
      %17 = arith.mulf %16, %cst_11 : f32
      %18 = vector.broadcast %17 : f32 to vector<1x1xf32>
      %c0_12 = arith.constant 0 : index
      %c0_13 = arith.constant 0 : index
      %19 = vector.load %arg2[%c0_12, %c0_13] : memref<1x1xf32, #tpu.memory_space<vmem>>, vector<1x1xf32>
      tpu.vector_store %arg2[%c0_12, %c0_13], %18 {strides = array<i32>} : memref<1x1xf32, #tpu.memory_space<vmem>>, vector<1x1xf32>,
    } else {
    }
    return
  }
  func.func @transform_0(%arg0: i32) -> (i32, i32) {
    %c0_i32 = arith.constant 0 : i32
    %c0_i32_0 = arith.constant 0 : i32
    return %arg0, %c0_i32 : i32, i32
  }
  func.func @transform_1(%arg0: i32) -> (i32, i32) {
    %c0_i32 = arith.constant 0 : i32
    %c0_i32_0 = arith.constant 0 : i32
    %c0_i32_1 = arith.constant 0 : i32
    return %c0_i32, %c0_i32_0 : i32, i32
  }
}

</mosaic_0001>

<llo_original>
// kernel: tpu_custom_call.1
$region0: #{tpu_custom_call.1}
  #allocation0 [shape = 'u32[]', space=smem, size = 0x4, offset = 0x4, fixed_abs, tag = 'smem constant byte address 0x4 - core index']
  #allocation1 [shape = 'u32[144,128]{1,0:T(1,128)}', space=vmem, size = 0x12000, scoped, tag = 'internal scratch']
  #allocation2 [shape = 'f32[1,4]{1,0:T(1,128)}', space=vmem, size = 0x200, scoped, tag = 'scratch operand']
  %s0 = inlined_call_operand.hbm [shape: f32[3,4], index: 0, kind: input, shape index: {}]
  %s1 = inlined_call_operand.hbm [shape: f32[1,1], index: 1, kind: output, shape index: {}]
  %s2 = sld [smem:[#allocation0]]
  $region26: #{tpu_custom_call.1} parent=0
    _
  %s4 = ssub.s32 1, %s2
  %s5 = scalar_select 0, %s4, %s2
  $region1: #{tpu_custom_call.1} parent=0
    #allocation3 [shape = 'u8[2048]{0}', space=vmem, size = 0x800, scoped, tag = 'input window, operand 0, single buffered']
    #allocation4 [shape = 's32[1]{0}', space=sflag, size = 0x4, scoped, tag = 'scoped memory for tpu_custom_call.1']
    #allocation5 [shape = 's32[1]{0}', space=sflag, size = 0x4, scoped, tag = 'scoped memory for tpu_custom_call.1']
    #allocation6 [shape = 'u8[512]{0}', space=vmem, size = 0x400, scoped, tag = 'output window, operand 0, single buffered']
    %6 = vsyncpa [#allocation4], 0
    %7 = vsyncpa [#allocation5], 0
    // Predicated region
    $region2: #{tpu_custom_call.1} parent=1 // pred_check
      _
    $region3: #{tpu_custom_call.1} parent=1 // pred_check_branch
      %9 = sbr.rel (0) target = $region5
    $region4: #{tpu_custom_call.1} parent=1 // pred_region
      %s11 = ssub.s32 64, 64
      %12 = vsyncadd [#allocation4], %s11
      %s14 = sshll.u32 [#allocation3], 4
      %s15 = int_to_ptr.vmem [resolvable:$true] %s14
      %17 = dma.hbm_to_vmem [thread:$0]  %s0, 64, %s15, [#allocation4]
    $region5: #{tpu_custom_call.1} parent=1 // pred_fallthru
      _
    // Predicated region
    $region6: #{tpu_custom_call.1} parent=1 // pred_check
      _
    $region7: #{tpu_custom_call.1} parent=1 // pred_check_branch
      %19 = sbr.rel (0) target = $region9
    $region8: #{tpu_custom_call.1} parent=1 // pred_region
      %20 = dma.done [#allocation4], 64
    $region9: #{tpu_custom_call.1} parent=1 // pred_fallthru
      _
    %p21 = scmp.eq.s32.totalorder 0, 0
    // Predicated region
    $region10: #{tpu_custom_call.1} parent=1 // pred_check
      %p22 = pneg %p21
    $region11: #{tpu_custom_call.1} parent=1 // pred_check_branch
      %24 = sbr.rel (%p22) target = $region13
    $region12: #{tpu_custom_call.1} parent=1 // pred_region
      %vm25 = vcmask 24576
      %26 = vst.msk [vmem:[#allocation2] sm:$0x1] %vm25, 0.0
    $region13: #{tpu_custom_call.1} parent=1 // pred_fallthru
      _
    %v27 = vld [vmem:[#allocation3] sm:$0x7]
    %v28 = vld [vmem:[#allocation2] sm:$0x1]
    %vm29 = vcmask 26624
    %v30 = vsel %vm29, %v27, 0.0
    %v31 = vrot.slane %v30, 4
    %v32 = vadd.f32 %v30, %v31
    %v33 = vrot.slane %v32, 2
    %v34 = vadd.f32 %v32, %v33
    %v35 = vrot.slane %v34, 1
    %v36 = vadd.f32 %v34, %v35
    %v37 = vadd.f32 %v28, %v36
    %vm38 = vcmask 24576
    %39 = vst.msk [vmem:[#allocation2] sm:$0x1] %vm38, %v37
    // Predicated region
    $region14: #{tpu_custom_call.1} parent=1 // pred_check
      %p40 = pneg %p21
    $region15: #{tpu_custom_call.1} parent=1 // pred_check_branch
      %42 = sbr.rel (%p40) target = $region17
    $region16: #{tpu_custom_call.1} parent=1 // pred_region
      %v43 = vld [vmem:[#allocation2] sm:$0x1]
      %v44 = vsel %vm38, %v43, 0.0
      %45 = vadd.xlane.f32.xlu0 %v44
      %v46 = vpop.xlane.xlu0 %45
      %v47 = vrot.slane %v46, 4
      %v48 = vadd.f32 %v46, %v47
      %v49 = vrot.slane %v48, 2
      %v50 = vadd.f32 %v48, %v49
      %v51 = vrot.slane %v50, 1
      %v52 = vadd.f32 %v50, %v51
      %s53 = vtos %v52
      %s54 = smul.f32 %s53, 0.083333336
      %v55 = vstv %s54
      %vm56 = vcmask 0
      %57 = vst.msk [vmem:[#allocation6] sm:$0x1] %vm56, %v55
    $region17: #{tpu_custom_call.1} parent=1 // pred_fallthru
      _
    // Predicated region
    $region18: #{tpu_custom_call.1} parent=1 // pred_check
      _
    $region19: #{tpu_custom_call.1} parent=1 // pred_check_branch
      %59 = sbr.rel (0) target = $region21
    $region20: #{tpu_custom_call.1} parent=1 // pred_region
      %s61 = ssub.s32 16, 16
      %62 = vsyncadd [#allocation5], %s61
      %s64 = sshll.u32 [#allocation6], 4
      %s65 = int_to_ptr.vmem [resolvable:$true] %s64
      %67 = dma.vmem_to_hbm [thread:$0]  %s65, 16, %s1, [#allocation5]
    $region21: #{tpu_custom_call.1} parent=1 // pred_fallthru
      _
    // Predicated region
    $region22: #{tpu_custom_call.1} parent=1 // pred_check
      _
    $region23: #{tpu_custom_call.1} parent=1 // pred_check_branch
      %69 = sbr.rel (0) target = $region25
    $region24: #{tpu_custom_call.1} parent=1 // pred_region
      %70 = dma.done [#allocation5], 16
    $region25: #{tpu_custom_call.1} parent=1 // pred_fallthru
      _
    %71 = vsyncpa [#allocation4], 1
    %72 = vsyncpa [#allocation5], 1

</llo_original>
